<compile_context>
chip_gen: v6e
topology: v6e:2x2x1
jax: 0.10.0
libtpu: 0.0.40
codegen_flags: <defaults>
</compile_context>

<pallas_src>
import jax
import jax.numpy as jnp
from jax.experimental import pallas as pl
from jax.experimental.pallas import tpu as pltpu


# ------------------------------ fc1 kernel -----------------------------------

def _make_fc1_kernel(negative_slope, has_feedback):
    def kernel(*refs):
        if has_feedback:
            (z_ref, c_ref, w1z_ref, w1c_ref, b1_ref, a1_ref, fb_ref,
             x1_ref) = refs
        else:
            z_ref, c_ref, w1z_ref, w1c_ref, b1_ref, x1_ref = refs

        # fc1 split across the z- and c-facing halves of W1 (no concat needed).
        h = (jnp.dot(z_ref[...].astype(jnp.bfloat16), w1z_ref[...],
                     preferred_element_type=jnp.float32)
             + jnp.dot(c_ref[...].astype(jnp.bfloat16), w1c_ref[...],
                       preferred_element_type=jnp.float32)
             + b1_ref[...])
        x1 = jnp.where(h > 0, h, negative_slope * h)          # LeakyReLU(0.2)
        if has_feedback:
            x1 = x1 + a1_ref[0, 0] * fb_ref[...]              # a1 from SMEM
        x1_ref[...] = x1.astype(x1_ref.dtype)
    return kernel


# ------------------------------ fc3 kernel -----------------------------------

def _fc3_kernel(x1_ref, w3_ref, b3_ref, out_ref):
    j = pl.program_id(0)
    # (B, H1) bf16 @ (H1, tn) bf16 -> f32 accumulate on the MXU.
    y = jnp.dot(x1_ref[...], w3_ref[0], preferred_element_type=jnp.float32)
    y = y + b3_ref[pl.ds(j, 1), :]                            # resident bias row
    # sigmoid: exp + approx reciprocal both on the EUP slot.
    out_ref[...] = pl.reciprocal(1.0 + jnp.exp(-y), approx=True).astype(
        out_ref.dtype)


# ------------------------------ helpers --------------------------------------

def pack_fc3_weight(w3, *, tn=1024):
    """One-time HBM re-layout of W3: (H1, H2) -> (H2//tn, H1, tn).

    Each grid step of the streaming kernel then fetches one fully contiguous
    tile instead of H1 strided row slices."""
    h1, h2 = w3.shape
    tn = min(tn, h2)
    # Keep >= 2 N tiles so dimension_semantics=('parallel',) can shard the
    # W3 stream across v7x's two TensorCores.
    if h2 // tn < 2 and h2 % 2 == 0 and (h2 // 2) % 128 == 0:
        tn = h2 // 2
    assert h2 % tn == 0 and tn % 128 == 0, (h2, tn)
    return jnp.transpose(w3.reshape(h1, h2 // tn, tn), (1, 0, 2))


def unpack_fc3_weight(w3_tiled):
    nt, h1, tn = w3_tiled.shape
    return jnp.transpose(w3_tiled, (1, 0, 2)).reshape(h1, nt * tn)


def _pick_vmem_limit_bytes():
    # ~3/4 of physical VMEM, capped at 96 MiB:
    #   v5e/v6e (128 MiB) -> 96 MiB;  v7x (64 MiB / TC) -> 48 MiB.
    try:
        cap = pltpu.get_tpu_info().vmem_capacity_bytes
        return int(min(96 << 20, (cap * 3) // 4))
    except Exception:
        return 48 << 20


# ------------------------------ wrapper --------------------------------------

def generator_forward(z, c, params, a1=None, feedback_layers=None,
                      *, negative_slope=0.2, w3_buffer_count=None):
    """Generator.forward(z, a1, c, feedback_layers) -> sigmoid(fc3(...))."""
    w1z, w1c, b1 = params["fc1"]        # (Lz,H1) bf16, (Lc,H1) bf16, (1,H1) f32
    w3t, b3 = params["fc3"]             # (nt,H1,tn) bf16 (pre-tiled), (1,H2) f32

    B = z.shape[0]
    Lz, Lc = z.shape[1], c.shape[1]
    nt, H1, tn = w3t.shape
    H2 = nt * tn
    has_feedback = feedback_layers is not None
    vmem_limit = _pick_vmem_limit_bytes()

    # ---- stage 1: x1 = lrelu(fc1(cat(z,c))) [+ a1*fb], computed once (bf16) --
    fc1_in_specs = [
        pl.BlockSpec((B, Lz), lambda i: (0, 0)),
        pl.BlockSpec((B, Lc), lambda i: (0, 0)),
        pl.BlockSpec((Lz, H1), lambda i: (0, 0)),
        pl.BlockSpec((Lc, H1), lambda i: (0, 0)),
        pl.BlockSpec((1, H1), lambda i: (0, 0)),
    ]
    fc1_args = [z, c, w1z, w1c, b1]
    if has_feedback:
        fc1_in_specs.append(pl.BlockSpec((1, 1), lambda i: (0, 0),
                                         memory_space=pltpu.MemorySpace.SMEM))
        fc1_in_specs.append(pl.BlockSpec((B, H1), lambda i: (0, 0)))
        fc1_args.append(jnp.asarray(a1, jnp.float32).reshape(1, 1))
        fc1_args.append(feedback_layers)

    x1 = pl.pallas_call(
        _make_fc1_kernel(negative_slope, has_feedback),
        out_shape=jax.ShapeDtypeStruct((B, H1), jnp.bfloat16),
        grid=(1,),
        in_specs=fc1_in_specs,
        out_specs=pl.BlockSpec((B, H1), lambda i: (0, 0)),
        compiler_params=pltpu.CompilerParams(
            dimension_semantics=("arbitrary",),
            vmem_limit_bytes=vmem_limit),
    )(*fc1_args)

    # ---- stage 2: stream pre-tiled W3; resident x1 / b3; sigmoid -------------
    b3_tiled = b3.reshape(nt, tn)        # row j == output columns [j*tn,(j+1)*tn)

    w3_spec_kwargs = {}
    if w3_buffer_count is not None and w3_buffer_count != 2:
        # Deeper buffering (e.g. 3) pays off on v5e/v6e's 128 MiB VMEM.
        w3_spec_kwargs["pipeline_mode"] = pl.Buffered(w3_buffer_count)

    cost = pl.CostEstimate(
        flops=2 * B * H1 * H2,
        transcendentals=2 * B * H2,                       # exp + approx recip
        bytes_accessed=int(w3t.size * w3t.dtype.itemsize
                           + x1.size * x1.dtype.itemsize
                           + b3.size * b3.dtype.itemsize
                           + B * H2 * z.dtype.itemsize),
    )

    out = pl.pallas_call(
        _fc3_kernel,
        out_shape=jax.ShapeDtypeStruct((B, H2), z.dtype),
        grid=(nt,),
        in_specs=[
            pl.BlockSpec((B, H1), lambda j: (0, 0)),            # x1  (resident)
            pl.BlockSpec((1, H1, tn), lambda j: (j, 0, 0),      # W3  (streamed,
                         **w3_spec_kwargs),                     #  contiguous tile)
            pl.BlockSpec((nt, tn), lambda j: (0, 0)),           # b3  (resident)
        ],
        out_specs=pl.BlockSpec((B, tn), lambda j: (0, j)),      # lane-dense
        compiler_params=pltpu.CompilerParams(
            dimension_semantics=("parallel",),   # shard W3 stream across v7x TCs
            vmem_limit_bytes=vmem_limit),
        cost_estimate=cost,
    )(x1, w3t, b3_tiled)
    return out


# ------------------------------ params / reference ----------------------------

def init_params(key, latent, h1, h2, *, tn=1024, weight_dtype=jnp.bfloat16):
    """weights_init: W ~ N(0, 0.02), b = 0.  Weights stored (in, out), bf16.
    W1 pre-split into z-/c-facing halves; W3 pre-tiled for contiguous DMA."""
    d0 = latent * 2
    k1, k2 = jax.random.split(key)
    w1 = (0.02 * jax.random.normal(k1, (d0, h1), jnp.float32)).astype(weight_dtype)
    w3 = (0.02 * jax.random.normal(k2, (h1, h2), jnp.float32)).astype(weight_dtype)
    b1 = jnp.zeros((1, h1), jnp.float32)
    b3 = jnp.zeros((1, h2), jnp.float32)
    return {"fc1": (w1[:latent], w1[latent:], b1),
            "fc3": (pack_fc3_weight(w3, tn=tn), b3)}


def generator_reference(z, c, params, a1=None, feedback_layers=None):
    """Pure-JAX reference (f32 math on the bf16 weights)."""
    w1z, w1c, b1 = params["fc1"]
    w3t, b3 = params["fc3"]
    w1 = jnp.concatenate([w1z, w1c], axis=0).astype(jnp.float32)
    w3 = unpack_fc3_weight(w3t).astype(jnp.float32)
    x = jnp.concatenate([z, c], axis=-1)
    h = x @ w1 + b1
    x1 = jnp.where(h > 0, h, 0.2 * h)
    if feedback_layers is not None:
        x1 = x1 + a1 * feedback_layers
    return jax.nn.sigmoid(x1 @ w3 + b3)


# ------------------------------ main ------------------------------------------

if __name__ == "__main__":
    # Small shapes consistent with the module's structure
    # (real module: latent ~1024, layer_sizes=[4096, 8192]; scaled down here).
    B = 4
    LATENT = 32          # -> input_size = 64
    H1 = 256             # stands in for 4096
    H2 = 512             # stands in for 8192 (pre-tiled to 2 x (H1, 256))

    key = jax.random.PRNGKey(0)
    kz, kc, kp, kf = jax.random.split(key, 4)

    z = jax.random.normal(kz, (B, LATENT), dtype=jnp.float32)
    c = jax.random.normal(kc, (B, LATENT), dtype=jnp.float32)
    fb = jax.random.normal(kf, (B, H1), dtype=jnp.float32)
    params = init_params(kp, LATENT, H1, H2)

    # --- plain path: forward(z, c=c) ---
    fwd = jax.jit(generator_forward)
    out = fwd(z, c, params)
    jax.block_until_ready(out)
    ref = generator_reference(z, c, params)
    assert out.shape == (B, H2)
    assert jnp.allclose(out, ref, atol=5e-3, rtol=5e-3), \
        float(jnp.max(jnp.abs(out - ref)))

    # --- feedback path: forward(z, a1, c, feedback_layers) ---
    a1 = 0.5
    fwd_fb = jax.jit(
        lambda z_, c_, fb_: generator_forward(z_, c_, params, a1=a1,
                                              feedback_layers=fb_))
    out_fb = fwd_fb(z, c, fb)
    jax.block_until_ready(out_fb)
    ref_fb = generator_reference(z, c, params, a1=a1, feedback_layers=fb)
    assert jnp.allclose(out_fb, ref_fb, atol=5e-3, rtol=5e-3), \
        float(jnp.max(jnp.abs(out_fb - ref_fb)))

    print("KERNEL_OK")
</pallas_src>

<mosaic_0001>
module attributes {stable_mosaic.version = 11 : i64} {
  func.func @kernel(%arg0: i32, %arg1: memref<4x32xf32, #tpu.memory_space<vmem>>, %arg2: memref<4x32xf32, #tpu.memory_space<vmem>>, %arg3: memref<32x256xbf16, #tpu.memory_space<vmem>>, %arg4: memref<32x256xbf16, #tpu.memory_space<vmem>>, %arg5: memref<1x256xf32, #tpu.memory_space<vmem>>, %arg6: memref<4x256xbf16, #tpu.memory_space<vmem>>) attributes {dimension_semantics = [#tpu.dimension_semantics<arbitrary>], iteration_bounds = array<i64: 1>, scalar_prefetch = 0 : i64, scratch_operands = 0 : i64, tpu.core_type = #tpu.core_type<tc>, window_params = [{pipeline_mode = #tpu.pipeline_mode<synchronous>, transform_indices = @transform_0, window_bounds = array<i64: 4, 32>}, {pipeline_mode = #tpu.pipeline_mode<synchronous>, transform_indices = @transform_1, window_bounds = array<i64: 4, 32>}, {pipeline_mode = #tpu.pipeline_mode<synchronous>, transform_indices = @transform_2, window_bounds = array<i64: 32, 256>}, {pipeline_mode = #tpu.pipeline_mode<synchronous>, transform_indices = @transform_3, window_bounds = array<i64: 32, 256>}, {pipeline_mode = #tpu.pipeline_mode<synchronous>, transform_indices = @transform_4, window_bounds = array<i64: 1, 256>}, {pipeline_mode = #tpu.pipeline_mode<synchronous>, transform_indices = @transform_5, window_bounds = array<i64: 4, 256>}]} {
    %c0 = arith.constant 0 : index
    %c0_0 = arith.constant 0 : index
    %0 = vector.load %arg1[%c0, %c0_0] : memref<4x32xf32, #tpu.memory_space<vmem>>, vector<4x32xf32>
    %1 = arith.truncf %0 : vector<4x32xf32> to vector<4x32xbf16>
    %c0_1 = arith.constant 0 : index
    %c0_2 = arith.constant 0 : index
    %2 = vector.load %arg3[%c0_1, %c0_2] : memref<32x256xbf16, #tpu.memory_space<vmem>>, vector<32x256xbf16>
    %cst = arith.constant dense<0.000000e+00> : vector<4x256xf32>
    %3 = tpu.matmul %1, %2, %cst {dimension_numbers = #tpu.dot_dimension_numbers<[1], [0], [0], [1], [0, 0, 1, 1], [], []>} : vector<4x32xbf16>, vector<32x256xbf16>, vector<4x256xf32> -> vector<4x256xf32>
    %c0_3 = arith.constant 0 : index
    %c0_4 = arith.constant 0 : index
    %4 = vector.load %arg2[%c0_3, %c0_4] : memref<4x32xf32, #tpu.memory_space<vmem>>, vector<4x32xf32>
    %5 = arith.truncf %4 : vector<4x32xf32> to vector<4x32xbf16>
    %c0_5 = arith.constant 0 : index
    %c0_6 = arith.constant 0 : index
    %6 = vector.load %arg4[%c0_5, %c0_6] : memref<32x256xbf16, #tpu.memory_space<vmem>>, vector<32x256xbf16>
    %cst_7 = arith.constant dense<0.000000e+00> : vector<4x256xf32>
    %7 = tpu.matmul %5, %6, %cst_7 {dimension_numbers = #tpu.dot_dimension_numbers<[1], [0], [0], [1], [0, 0, 1, 1], [], []>} : vector<4x32xbf16>, vector<32x256xbf16>, vector<4x256xf32> -> vector<4x256xf32>
    %8 = arith.addf %3, %7 : vector<4x256xf32>
    %c0_8 = arith.constant 0 : index
    %c0_9 = arith.constant 0 : index
    %9 = vector.load %arg5[%c0_8, %c0_9] : memref<1x256xf32, #tpu.memory_space<vmem>>, vector<1x256xf32>
    %10 = vector.broadcast %9 : vector<1x256xf32> to vector<4x256xf32>
    %11 = arith.addf %8, %10 : vector<4x256xf32>
    %cst_10 = arith.constant 0.000000e+00 : f32
    %12 = vector.broadcast %cst_10 : f32 to vector<4x256xf32>
    %13 = arith.cmpf ogt, %11, %12 : vector<4x256xf32>
    %cst_11 = arith.constant 2.000000e-01 : f32
    %14 = vector.broadcast %cst_11 : f32 to vector<4x256xf32>
    %15 = arith.mulf %14, %11 : vector<4x256xf32>
    %16 = arith.select %13, %11, %15 : vector<4x256xi1>, vector<4x256xf32>
    %17 = arith.truncf %16 : vector<4x256xf32> to vector<4x256xbf16>
    %c0_12 = arith.constant 0 : index
    %c0_13 = arith.constant 0 : index
    %18 = vector.load %arg6[%c0_12, %c0_13] : memref<4x256xbf16, #tpu.memory_space<vmem>>, vector<4x256xbf16>
    tpu.vector_store %arg6[%c0_12, %c0_13], %17 {strides = array<i32>} : memref<4x256xbf16, #tpu.memory_space<vmem>>, vector<4x256xbf16>,
    return
  }
  func.func @transform_0(%arg0: i32) -> (i32, i32) {
    %c0_i32 = arith.constant 0 : i32
    %c0_i32_0 = arith.constant 0 : i32
    %c0_i32_1 = arith.constant 0 : i32
    return %c0_i32, %c0_i32_0 : i32, i32
  }
  func.func @transform_1(%arg0: i32) -> (i32, i32) {
    %c0_i32 = arith.constant 0 : i32
    %c0_i32_0 = arith.constant 0 : i32
    %c0_i32_1 = arith.constant 0 : i32
    return %c0_i32, %c0_i32_0 : i32, i32
  }
  func.func @transform_2(%arg0: i32) -> (i32, i32) {
    %c0_i32 = arith.constant 0 : i32
    %c0_i32_0 = arith.constant 0 : i32
    %c0_i32_1 = arith.constant 0 : i32
    return %c0_i32, %c0_i32_0 : i32, i32
  }
  func.func @transform_3(%arg0: i32) -> (i32, i32) {
    %c0_i32 = arith.constant 0 : i32
    %c0_i32_0 = arith.constant 0 : i32
    %c0_i32_1 = arith.constant 0 : i32
    return %c0_i32, %c0_i32_0 : i32, i32
  }
  func.func @transform_4(%arg0: i32) -> (i32, i32) {
    %c0_i32 = arith.constant 0 : i32
    %c0_i32_0 = arith.constant 0 : i32
    %c0_i32_1 = arith.constant 0 : i32
    return %c0_i32, %c0_i32_0 : i32, i32
  }
  func.func @transform_5(%arg0: i32) -> (i32, i32) {
    %c0_i32 = arith.constant 0 : i32
    %c0_i32_0 = arith.constant 0 : i32
    %c0_i32_1 = arith.constant 0 : i32
    return %c0_i32, %c0_i32_0 : i32, i32
  }
}

module attributes {stable_mosaic.version = 11 : i64} {
  func.func @_fc3_kernel(%arg0: i32, %arg1: memref<4x256xbf16, #tpu.memory_space<vmem>>, %arg2: memref<1x256x256xbf16, #tpu.memory_space<vmem>>, %arg3: memref<2x256xf32, #tpu.memory_space<vmem>>, %arg4: memref<4x256xf32, #tpu.memory_space<vmem>>) attributes {dimension_semantics = [#tpu.dimension_semantics<parallel>], iteration_bounds = array<i64: 2>, scalar_prefetch = 0 : i64, scratch_operands = 0 : i64, tpu.core_type = #tpu.core_type<tc>, window_params = [{pipeline_mode = #tpu.pipeline_mode<synchronous>, transform_indices = @transform_0, window_bounds = array<i64: 4, 256>}, {transform_indices = @transform_1, window_bounds = array<i64: 1, 256, 256>}, {pipeline_mode = #tpu.pipeline_mode<synchronous>, transform_indices = @transform_2, window_bounds = array<i64: 2, 256>}, {transform_indices = @transform_3, window_bounds = array<i64: 4, 256>}]} {
    %c0 = arith.constant 0 : index
    %c0_0 = arith.constant 0 : index
    %0 = vector.load %arg1[%c0, %c0_0] : memref<4x256xbf16, #tpu.memory_space<vmem>>, vector<4x256xbf16>
    %c0_1 = arith.constant 0 : index
    %c0_2 = arith.constant 0 : index
    %c0_3 = arith.constant 0 : index
    %1 = vector.load %arg2[%c0_1, %c0_2, %c0_3] : memref<1x256x256xbf16, #tpu.memory_space<vmem>>, vector<1x256x256xbf16>
    %2 = vector.shape_cast %1 : vector<1x256x256xbf16> to vector<256x256xbf16>
    %cst = arith.constant dense<0.000000e+00> : vector<4x256xf32>
    %3 = tpu.matmul %0, %2, %cst {dimension_numbers = #tpu.dot_dimension_numbers<[1], [0], [0], [1], [0, 0, 1, 1], [], []>} : vector<4x256xbf16>, vector<256x256xbf16>, vector<4x256xf32> -> vector<4x256xf32>
    %4 = arith.index_cast %arg0 : i32 to index
    %c0_4 = arith.constant 0 : index
    %5 = vector.load %arg3[%4, %c0_4] : memref<2x256xf32, #tpu.memory_space<vmem>>, vector<1x256xf32>
    %6 = vector.broadcast %5 : vector<1x256xf32> to vector<4x256xf32>
    %7 = arith.addf %3, %6 : vector<4x256xf32>
    %cst_5 = arith.constant 0.000000e+00 : f32
    %8 = vector.broadcast %cst_5 : f32 to vector<4x256xf32>
    %9 = arith.subf %8, %7 : vector<4x256xf32>
    %10 = math.exp %9 : vector<4x256xf32>
    %cst_6 = arith.constant 1.000000e+00 : f32
    %11 = vector.broadcast %cst_6 : f32 to vector<4x256xf32>
    %12 = arith.addf %11, %10 : vector<4x256xf32>
    %13 = tpu.reciprocal %12 {approx = true} : vector<4x256xf32> -> vector<4x256xf32>
    %c0_7 = arith.constant 0 : index
    %c0_8 = arith.constant 0 : index
    %14 = vector.load %arg4[%c0_7, %c0_8] : memref<4x256xf32, #tpu.memory_space<vmem>>, vector<4x256xf32>
    tpu.vector_store %arg4[%c0_7, %c0_8], %13 {strides = array<i32>} : memref<4x256xf32, #tpu.memory_space<vmem>>, vector<4x256xf32>,
    return
  }
  func.func @transform_0(%arg0: i32) -> (i32, i32) {
    %c0_i32 = arith.constant 0 : i32
    %c0_i32_0 = arith.constant 0 : i32
    %c0_i32_1 = arith.constant 0 : i32
    return %c0_i32, %c0_i32_0 : i32, i32
  }
  func.func @transform_1(%arg0: i32) -> (i32, i32, i32) {
    %c0_i32 = arith.constant 0 : i32
    %c0_i32_0 = arith.constant 0 : i32
    %c0_i32_1 = arith.constant 0 : i32
    return %arg0, %c0_i32, %c0_i32_0 : i32, i32, i32
  }
  func.func @transform_2(%arg0: i32) -> (i32, i32) {
    %c0_i32 = arith.constant 0 : i32
    %c0_i32_0 = arith.constant 0 : i32
    %c0_i32_1 = arith.constant 0 : i32
    return %c0_i32, %c0_i32_0 : i32, i32
  }
  func.func @transform_3(%arg0: i32) -> (i32, i32) {
    %c0_i32 = arith.constant 0 : i32
    %c0_i32_0 = arith.constant 0 : i32
    return %c0_i32, %arg0 : i32, i32
  }
}

</mosaic_0001>

<llo_original>
// kernel: generator_forward.2
$region0: #{generator_forward.2}
  #allocation0 [shape = 'u32[]', space=smem, size = 0x4, offset = 0x4, fixed_abs, tag = 'smem constant byte address 0x4 - core index']
  #allocation1 [shape = 'u32[144,128]{1,0:T(1,128)}', space=vmem, size = 0x12000, scoped, tag = 'internal scratch']
  %s0 = inlined_call_operand.vmem [shape: f32[4,32], index: 0, kind: input, shape index: {}]
  %s1 = inlined_call_operand.vmem [shape: f32[4,32], index: 1, kind: input, shape index: {}]
  %s2 = inlined_call_operand.hbm [shape: bf16[32,256], index: 2, kind: input, shape index: {}]
  %s3 = inlined_call_operand.hbm [shape: bf16[32,256], index: 3, kind: input, shape index: {}]
  %s4 = inlined_call_operand.vmem [shape: f32[1,256], index: 4, kind: input, shape index: {}]
  %s5 = inlined_call_operand.vmem [shape: bf16[4,256], index: 5, kind: output, shape index: {}]
  %s6 = sld [smem:[#allocation0]]
  $region38: #{generator_forward.2} parent=0
    _
  %s8 = ssub.s32 1, %s6
  %s9 = scalar_select 0, %s8, %s6
  $region1: #{generator_forward.2} parent=0
    #allocation2 [shape = 'u8[16384]{0}', space=vmem, size = 0x4000, scoped, tag = 'input window, operand 2, single buffered']
    #allocation3 [shape = 's32[1]{0}', space=sflag, size = 0x4, scoped, tag = 'scoped memory for generator_forward.2']
    #allocation4 [shape = 'u8[16384]{0}', space=vmem, size = 0x4000, scoped, tag = 'input window, operand 3, single buffered']
    #allocation5 [shape = 's32[1]{0}', space=sflag, size = 0x4, scoped, tag = 'scoped memory for generator_forward.2']
    %10 = vsyncpa [#allocation3], 0
    %11 = vsyncpa [#allocation5], 0
    // Predicated region
    $region2: #{generator_forward.2} parent=1 // pred_check
      _
    $region3: #{generator_forward.2} parent=1 // pred_check_branch
      %13 = sbr.rel (0) target = $region5
    $region4: #{generator_forward.2} parent=1 // pred_region
      _
    $region5: #{generator_forward.2} parent=1 // pred_fallthru
      _
    // Predicated region
    $region6: #{generator_forward.2} parent=1 // pred_check
      _
    $region7: #{generator_forward.2} parent=1 // pred_check_branch
      %15 = sbr.rel (0) target = $region9
    $region8: #{generator_forward.2} parent=1 // pred_region
      _
    $region9: #{generator_forward.2} parent=1 // pred_fallthru
      _
    // Predicated region
    $region10: #{generator_forward.2} parent=1 // pred_check
      _
    $region11: #{generator_forward.2} parent=1 // pred_check_branch
      %17 = sbr.rel (0) target = $region13
    $region12: #{generator_forward.2} parent=1 // pred_region
      %s19 = ssub.s32 512, 512
      %20 = vsyncadd [#allocation3], %s19
      %s21 = sshll.u32 [#allocation2], 4
      %s22 = int_to_ptr.vmem [resolvable:$true] %s21
      %27 = dma.hbm_to_vmem [thread:$0]  %s2, 512, %s22, [#allocation3], 128, 128, 8
    $region13: #{generator_forward.2} parent=1 // pred_fallthru
      _
    // Predicated region
    $region14: #{generator_forward.2} parent=1 // pred_check
      _
    $region15: #{generator_forward.2} parent=1 // pred_check_branch
      %29 = sbr.rel (0) target = $region17
    $region16: #{generator_forward.2} parent=1 // pred_region
      %s31 = ssub.s32 512, 512
      %32 = vsyncadd [#allocation5], %s31
      %s33 = sshll.u32 [#allocation4], 4
      %s34 = int_to_ptr.vmem [resolvable:$true] %s33
      %39 = dma.hbm_to_vmem [thread:$0]  %s3, 512, %s34, [#allocation5], 128, 128, 8
    $region17: #{generator_forward.2} parent=1 // pred_fallthru
      _
    // Predicated region
    $region18: #{generator_forward.2} parent=1 // pred_check
      _
    $region19: #{generator_forward.2} parent=1 // pred_check_branch
      %41 = sbr.rel (0) target = $region21
    $region20: #{generator_forward.2} parent=1 // pred_region
      _
    $region21: #{generator_forward.2} parent=1 // pred_fallthru
      _
    // Predicated region
    $region22: #{generator_forward.2} parent=1 // pred_check
      _
    $region23: #{generator_forward.2} parent=1 // pred_check_branch
      %43 = sbr.rel (0) target = $region25
    $region24: #{generator_forward.2} parent=1 // pred_region
      %44 = dma.done [#allocation3], 512
    $region25: #{generator_forward.2} parent=1 // pred_fallthru
      _
    // Predicated region
    $region26: #{generator_forward.2} parent=1 // pred_check
      _
    $region27: #{generator_forward.2} parent=1 // pred_check_branch
      %46 = sbr.rel (0) target = $region29
    $region28: #{generator_forward.2} parent=1 // pred_region
      %47 = dma.done [#allocation5], 512
    $region29: #{generator_forward.2} parent=1 // pred_fallthru
      _
    %v49 = vld [vmem:[%s0] sm:$0xf]
    %v50 = vpack.c.bf16 %v49, %v49
    %v51 = vld [vmem:[#allocation2] sm:$0xff]
    %v52 = vld [vmem:[#allocation2 + $0x8] sm:$0xff]
    %v53 = vld [vmem:[#allocation2 + $0x10] sm:$0xff]
    %v54 = vld [vmem:[#allocation2 + $0x18] sm:$0xff]
    %v55 = vld [vmem:[%s1] sm:$0xf]
    %v56 = vpack.c.bf16 %v55, %v55
    %v57 = vld [vmem:[#allocation4] sm:$0xff]
    %v58 = vld [vmem:[#allocation4 + $0x8] sm:$0xff]
    %v59 = vld [vmem:[#allocation4 + $0x10] sm:$0xff]
    %v60 = vld [vmem:[#allocation4 + $0x18] sm:$0xff]
    %v65 = vunpack.c.l.b16 %v57
    %v66 = vunpack.c.h.b16 %v57
    %v67 = vunpack.c.l.b16 %v58
    %v68 = vunpack.c.h.b16 %v58
    %v69 = vunpack.c.l.b16 %v59
    %v70 = vunpack.c.h.b16 %v59
    %v71 = vunpack.c.l.b16 %v60
    %v72 = vunpack.c.h.b16 %v60
    %v73 = vpack.c.b16 %v67, %v65
    %v74 = vpack.c.b16 %v68, %v66
    %v75 = vpack.c.b16 %v71, %v69
    %v76 = vpack.c.b16 %v72, %v70
    %vm81 = vcmask 261120
    %v83 = vsel %vm81, %v56, 0
    %85 = vmatprep.subr.bf16.mxu0 0
    %86 = vmatpush1.bf16.msra.mxu0 0
    %87 = vmatprep.subr.bf16.mxu0 0
    %88 = vmatpush1.bf16.msra.mxu0 0
    %89 = vmatprep.subr.bf16.mxu0 0
    %90 = vmatpush1.bf16.msra.mxu0 0
    %91 = vmatprep.subr.bf16.mxu0 0
    %92 = vmatpush1.bf16.msra.mxu0 0
    %93 = vmatprep.subr.bf16.mxu0 0
    %94 = vmatpush1.bf16.msra.mxu0 0
    %95 = vmatprep.subr.bf16.mxu0 0
    %96 = vmatpush1.bf16.msra.mxu0 0
    %97 = vmatprep.subr.bf16.mxu0 %v76
    %98 = vmatpush1.bf16.msra.mxu0 %v75
    %99 = vmatprep.subr.bf16.mxu0 %v74
    %100 = vmatpush1.bf16.msra.mxu0 %v73
    %101 = vmatprep.subr.bf16.mxu0 0
    %102 = vmatpush2.bf16.msra.mxu0 0
    %103 = vmatprep.subr.bf16.mxu0 0
    %104 = vmatpush2.bf16.msra.mxu0 0
    %105 = vmatprep.subr.bf16.mxu0 0
    %106 = vmatpush2.bf16.msra.mxu0 0
    %107 = vmatprep.subr.bf16.mxu0 0
    %108 = vmatpush2.bf16.msra.mxu0 0
    %109 = vmatprep.subr.bf16.mxu0 0
    %110 = vmatpush2.bf16.msra.mxu0 0
    %111 = vmatprep.subr.bf16.mxu0 0
    %112 = vmatpush2.bf16.msra.mxu0 0
    %113 = vmatprep.subr.bf16.mxu0 0
    %114 = vmatpush2.bf16.msra.mxu0 0
    %115 = vmatprep.subr.bf16.mxu0 0
    %116 = vmatpush2.bf16.msra.mxu0 0
    %117 = vmatprep.mubr.bf16.mxu0 0
    %118 = vmatmul.mubr.bf16.gmra.mxu0 %v83
    %v119 = vpop.f32.mrf.mxu0
    %v120 = vadd.f32 0.0, %v119
    %v121 = vpop.f32.mrf.mxu0
    %v122 = vadd.f32 0.0, %v121
    %v123 = vpop.f32.mrf.mxu0
    %v124 = vpop.f32.mrf.mxu0
    %125 = vdwg.mxu0
    %v130 = vunpack.c.l.b16 %v51
    %v131 = vunpack.c.h.b16 %v51
    %v132 = vunpack.c.l.b16 %v52
    %v133 = vunpack.c.h.b16 %v52
    %v134 = vunpack.c.l.b16 %v53
    %v135 = vunpack.c.h.b16 %v53
    %v136 = vunpack.c.l.b16 %v54
    %v137 = vunpack.c.h.b16 %v54
    %v138 = vpack.c.b16 %v132, %v130
    %v139 = vpack.c.b16 %v133, %v131
    %v140 = vpack.c.b16 %v136, %v134
    %v141 = vpack.c.b16 %v137, %v135
    %v147 = vsel %vm81, %v50, 0
    %149 = vmatprep.subr.bf16.mxu0 0
    %150 = vmatpush1.bf16.msra.mxu0 0
    %151 = vmatprep.subr.bf16.mxu0 0
    %152 = vmatpush1.bf16.msra.mxu0 0
    %153 = vmatprep.subr.bf16.mxu0 0
    %154 = vmatpush1.bf16.msra.mxu0 0
    %155 = vmatprep.subr.bf16.mxu0 0
    %156 = vmatpush1.bf16.msra.mxu0 0
    %157 = vmatprep.subr.bf16.mxu0 0
    %158 = vmatpush1.bf16.msra.mxu0 0
    %159 = vmatprep.subr.bf16.mxu0 0
    %160 = vmatpush1.bf16.msra.mxu0 0
    %161 = vmatprep.subr.bf16.mxu0 %v141
    %162 = vmatpush1.bf16.msra.mxu0 %v140
    %163 = vmatprep.subr.bf16.mxu0 %v139
    %164 = vmatpush1.bf16.msra.mxu0 %v138
    %165 = vmatprep.subr.bf16.mxu0 0
    %166 = vmatpush2.bf16.msra.mxu0 0
    %167 = vmatprep.subr.bf16.mxu0 0
    %168 = vmatpush2.bf16.msra.mxu0 0
    %169 = vmatprep.subr.bf16.mxu0 0
    %170 = vmatpush2.bf16.msra.mxu0 0
    %171 = vmatprep.subr.bf16.mxu0 0
    %172 = vmatpush2.bf16.msra.mxu0 0
    %173 = vmatprep.subr.bf16.mxu0 0
    %174 = vmatpush2.bf16.msra.mxu0 0
    %175 = vmatprep.subr.bf16.mxu0 0
    %176 = vmatpush2.bf16.msra.mxu0 0
    %177 = vmatprep.subr.bf16.mxu0 0
    %178 = vmatpush2.bf16.msra.mxu0 0
    %179 = vmatprep.subr.bf16.mxu0 0
    %180 = vmatpush2.bf16.msra.mxu0 0
    %181 = vmatprep.mubr.bf16.mxu0 0
    %182 = vmatmul.mubr.bf16.gmra.mxu0 %v147
    %v183 = vpop.f32.mrf.mxu0
    %v184 = vadd.f32 %v120, %v183
    %v185 = vpop.f32.mrf.mxu0
    %v186 = vadd.f32 %v122, %v185
    %v187 = vpop.f32.mrf.mxu0
    %v188 = vpop.f32.mrf.mxu0
    %189 = vdwg.mxu0
    %v190 = vld [vmem:[%s4] sm:$0x3]
    %v192 = vlaneseq
    %v193 = vshrl.u32 %v192, 7
    %v194 = vsub.s32 0, %v193
    %v195 = vrot.slane %v190, %v194
    %v196 = vlaneseq
    %v197 = vshrl.u32 %v196, 7
    %v198 = vsub.s32 1, %v197
    %v199 = vrot.slane %v190, %v198
    %v202 = vadd.f32 %v184, %v195
    %v203 = vadd.f32 %v186, %v199
    %vm204 = vcmp.gt.f32.partialorder %v202, 0.0
    %vm205 = vcmp.gt.f32.partialorder %v203, 0.0
    %v206 = vmul.f32 %v202, 0.2
    %v207 = vmul.f32 %v203, 0.2
    %v208 = vsel %vm204, %v202, %v206
    %v209 = vsel %vm205, %v203, %v207
    %v210 = vpack.c.bf16 %v208, %v208
    %v211 = vpack.c.bf16 %v209, %v209
    %v214 = vcombine.low %v210, %v211
    %v216 = vunpack.c.l.s4 1983009808
    %v217 = vunpack.c.0.s8 %v216
    %v218 = vlaneseq
    %v219 = vshrl.u32 %v218, 7
    %v220 = vsub.s32 %v217, %v219
    %v221 = vrot.slane %v214, %v220
    %223 = vst [vmem:[%s5] sm:$0xf] %v221
    // Predicated region
    $region30: #{generator_forward.2} parent=1 // pred_check
      _
    $region31: #{generator_forward.2} parent=1 // pred_check_branch
      %225 = sbr.rel (0) target = $region33
    $region32: #{generator_forward.2} parent=1 // pred_region
      _
    $region33: #{generator_forward.2} parent=1 // pred_fallthru
      _
    // Predicated region
    $region34: #{generator_forward.2} parent=1 // pred_check
      _
    $region35: #{generator_forward.2} parent=1 // pred_check_branch
      %227 = sbr.rel (0) target = $region37
    $region36: #{generator_forward.2} parent=1 // pred_region
      _
    $region37: #{generator_forward.2} parent=1 // pred_fallthru
      _
    %228 = vsyncpa [#allocation3], 1
    %229 = vsyncpa [#allocation5], 1

// kernel: generator_forward.3
$region0: #{generator_forward.3}
  #allocation0 [shape = 'u32[]', space=smem, size = 0x4, offset = 0x4, fixed_abs, tag = 'smem constant byte address 0x4 - core index']
  #allocation1 [shape = 'u32[144,128]{1,0:T(1,128)}', space=vmem, size = 0x12000, scoped, tag = 'internal scratch']
  %s0 = inlined_call_operand.vmem [shape: bf16[4,256], index: 0, kind: input, shape index: {}]
  %s1 = inlined_call_operand.hbm [shape: bf16[2,256,256], index: 1, kind: input, shape index: {}]
  %s2 = inlined_call_operand.vmem [shape: f32[2,256], index: 2, kind: input, shape index: {}]
  %s3 = inlined_call_operand.hbm [shape: f32[4,512], index: 3, kind: output, shape index: {}]
  %s4 = sld [smem:[#allocation0]]
  $region49: #{generator_forward.3} parent=0
    _
  %s6 = ssub.s32 1, %s4
  %s7 = scalar_select 0, %s6, %s4
  $region1: #{generator_forward.3} parent=0
    #allocation2 [shape = 'u8[262144]{0}', space=vmem, size = 0x40000, scoped, tag = 'input window, operand 1']
    #allocation3 [shape = 's32[2]{0}', space=sflag, size = 0x8, scoped, tag = 'scoped memory for generator_forward.3']
    #allocation4 [shape = 's32[2]{0}', space=sflag, size = 0x8, scoped, tag = 'scoped memory for generator_forward.3']
    #allocation5 [shape = 'u8[8192]{0}', space=vmem, size = 0x2000, scoped, tag = 'output window, operand 0']
    %8 = vsyncpa [#allocation3], 0
    %s9 = scalar_lea.sflag [#allocation3], 1
    %10 = vsyncpa %s9, 0
    %11 = vsyncpa [#allocation4], 0
    %s12 = scalar_lea.sflag [#allocation4], 1
    %13 = vsyncpa %s12, 0
    loop: start=0, step=1, limit=4
    $region2: #{generator_forward.3} parent=1 // loop_pre_header
      _
    $region3: #{generator_forward.3} parent=1 // loop_header
      %s15 = sphi 0, %s19
      %p16 = scmp.ge.s32.totalorder %s15, 4
      %s23 = sphi 0, %s23
      %s25 = sphi 0, %s23
      %s26 = sphi 0, %s25
      %s40 = sphi 0, %s26
      %s46 = sphi 0, %s48
      %s49 = sphi 0, %s46
      %s50 = sphi 0, %s49
      %s66 = sphi 0, %s50
      %s70 = sphi 0, %s70
      %s72 = sphi 0, %s70
      %s73 = sphi 0, %s72
      %s87 = sphi 0, %s73
      %s93 = sphi 0, %s95
      %s96 = sphi 0, %s93
      %s97 = sphi 0, %s96
      %s113 = sphi 0, %s97
    $region4: #{generator_forward.3} parent=1 // loop_header_branch
      %18 = sbr.rel (%p16) target = $region8
    $region5: #{generator_forward.3} parent=1 // loop_body
      %s20 = ssub.s32 %s15, 1
      %s21 = ssub.s32 %s15, 2
      %s22 = sadd.s32 %s15, 1
      %s24 = sadd.s32 %s23, 1
      %p27 = scmp.eq.s32.totalorder %s15, 1
      %p28 = scmp.ne.s32.totalorder %s23, %s25
      %p29 = scmp.eq.s32.totalorder %s15, 0
      %p30 = por %p28, %p29
      %p31 = scmp.ne.s32.totalorder %s23, %s25
      %p32 = scmp.eq.s32.totalorder %s20, 1
      %p33 = por %p31, %p32
      %p34 = scmp.ne.s32.totalorder %s25, %s26
      %p35 = scmp.eq.s32.totalorder %s20, 0
      %p36 = por %p34, %p35
      %p37 = scmp.ne.s32.totalorder %s25, %s26
      %p38 = scmp.eq.s32.totalorder %s21, 1
      %p39 = por %p37, %p38
      %p41 = scmp.ne.s32.totalorder %s26, %s40
      %p42 = scmp.eq.s32.totalorder %s21, 0
      %p43 = por %p41, %p42
      %s44 = ssub.s32 %s15, %s22
      %p45 = scmp.eq.s32.totalorder %s44, 0
      %s47 = sadd.s32 %s46, 1
      %s48 = scalar_select %p45, %s46, %s47
      %p51 = pneg %p45
      %p52 = scmp.eq.s32.totalorder %s15, 1
      %p53 = por %p51, %p52
      %p54 = scmp.ne.s32.totalorder %s46, %s49
      %p55 = scmp.eq.s32.totalorder %s15, 0
      %p56 = por %p54, %p55
      %p57 = scmp.ne.s32.totalorder %s46, %s49
      %p58 = scmp.eq.s32.totalorder %s20, 1
      %p59 = por %p57, %p58
      %p60 = scmp.ne.s32.totalorder %s49, %s50
      %p61 = scmp.eq.s32.totalorder %s20, 0
      %p62 = por %p60, %p61
      %p63 = scmp.ne.s32.totalorder %s49, %s50
      %p64 = scmp.eq.s32.totalorder %s21, 1
      %p65 = por %p63, %p64
      %p67 = scmp.ne.s32.totalorder %s50, %s66
      %p68 = scmp.eq.s32.totalorder %s21, 0
      %p69 = por %p67, %p68
      %s71 = sadd.s32 %s70, 1
      %p74 = scmp.eq.s32.totalorder %s15, 1
      %p75 = scmp.ne.s32.totalorder %s70, %s72
      %p76 = scmp.eq.s32.totalorder %s15, 0
      %p77 = por %p75, %p76
      %p78 = scmp.ne.s32.totalorder %s70, %s72
      %p79 = scmp.eq.s32.totalorder %s20, 1
      %p80 = por %p78, %p79
      %p81 = scmp.ne.s32.totalorder %s72, %s73
      %p82 = scmp.eq.s32.totalorder %s20, 0
      %p83 = por %p81, %p82
      %p84 = scmp.ne.s32.totalorder %s72, %s73
      %p85 = scmp.eq.s32.totalorder %s21, 1
      %p86 = por %p84, %p85
      %p88 = scmp.ne.s32.totalorder %s73, %s87
      %p89 = scmp.eq.s32.totalorder %s21, 0
      %p90 = por %p88, %p89
      %s91 = ssub.s32 %s15, %s22
      %p92 = scmp.eq.s32.totalorder %s91, 0
      %s94 = sadd.s32 %s93, 1
      %s95 = scalar_select %p92, %s93, %s94
      %p98 = pneg %p92
      %p99 = scmp.eq.s32.totalorder %s15, 1
      %p100 = por %p98, %p99
      %p101 = scmp.ne.s32.totalorder %s93, %s96
      %p102 = scmp.eq.s32.totalorder %s15, 0
      %p103 = por %p101, %p102
      %p104 = scmp.ne.s32.totalorder %s93, %s96
      %p105 = scmp.eq.s32.totalorder %s20, 1
      %p106 = por %p104, %p105
      %p107 = scmp.ne.s32.totalorder %s96, %s97
      %p108 = scmp.eq.s32.totalorder %s20, 0
      %p109 = por %p107, %p108
      %p110 = scmp.ne.s32.totalorder %s96, %s97
      %p111 = scmp.eq.s32.totalorder %s21, 1
      %p112 = por %p110, %p111
      %p114 = scmp.ne.s32.totalorder %s97, %s113
      %p115 = scmp.eq.s32.totalorder %s21, 0
      %p116 = por %p114, %p115
      %p117 = scmp.le.s32.totalorder 1, %s15
      %p118 = scmp.lt.s32.totalorder %s15, 3
      %p119 = pnand %p117, %p118
      %p120 = pneg %p119
      // Predicated region
      $region9: #{generator_forward.3} parent=5 // pred_check
        _
      $region10: #{generator_forward.3} parent=5 // pred_check_branch
        %122 = sbr.rel (%p119) target = $region12
      $region11: #{generator_forward.3} parent=5 // pred_region
        %s123 = ssub.s32 %s15, 1
        // Predicated region
        $region13: #{generator_forward.3} parent=11 // pred_check
          %p124 = pneg %p36
        $region14: #{generator_forward.3} parent=11 // pred_check_branch
          %126 = sbr.rel (%p124) target = $region16
        $region15: #{generator_forward.3} parent=11 // pred_region
          _
        $region16: #{generator_forward.3} parent=11 // pred_fallthru
          _
        // Predicated region
        $region17: #{generator_forward.3} parent=11 // pred_check
          %p127 = pneg %p83
        $region18: #{generator_forward.3} parent=11 // pred_check_branch
          %129 = sbr.rel (%p127) target = $region20
        $region19: #{generator_forward.3} parent=11 // pred_region
          _
        $region20: #{generator_forward.3} parent=11 // pred_fallthru
          _
      $region12: #{generator_forward.3} parent=5 // pred_fallthru
        _
      %p130 = scmp.lt.s32.totalorder %s15, 2
      // Predicated region
      $region21: #{generator_forward.3} parent=5 // pred_check
        %p131 = pneg %p130
      $region22: #{generator_forward.3} parent=5 // pred_check_branch
        %133 = sbr.rel (%p131) target = $region24
      $region23: #{generator_forward.3} parent=5 // pred_region
        // Predicated region
        $region25: #{generator_forward.3} parent=23 // pred_check
          %p134 = pneg %p56
        $region26: #{generator_forward.3} parent=23 // pred_check_branch
          %136 = sbr.rel (%p134) target = $region28
        $region27: #{generator_forward.3} parent=23 // pred_region
          %s137 = sand.u32 %s46, 1
          %s138 = scalar_lea.sflag [#allocation3], %s137
          %s139 = sand.u32 %s46, 1
          %s140 = smul.addr %s139, 256
          %s141 = scalar_lea.vmem [#allocation2], %s140
          %s143 = ssub.s32 4096, 4096
          %144 = vsyncadd %s138, %s143
          %s145 = smul.addr %s15, 64
          %s146 = smul.addr %s145, 64
          %s147 = scalar_lea.hbm %s1, %s146
          %s148 = sshll.u32 %s141, 4
          %s149 = int_to_ptr.vmem [resolvable:$true] %s148
          %154 = dma.hbm_to_vmem [thread:$0]  %s147, 4096, %s149, %s138, 128, 128, 8
        $region28: #{generator_forward.3} parent=23 // pred_fallthru
          _
      $region24: #{generator_forward.3} parent=5 // pred_fallthru
        _
      %p155 = scmp.le.s32.totalorder 1, %s15
      %p156 = scmp.lt.s32.totalorder %s15, 3
      %p157 = pnand %p155, %p156
      %p158 = pneg %p157
      // Predicated region
      $region29: #{generator_forward.3} parent=5 // pred_check
        _
      $region30: #{generator_forward.3} parent=5 // pred_check_branch
        %160 = sbr.rel (%p157) target = $region32
      $region31: #{generator_forward.3} parent=5 // pred_region
        %s161 = ssub.s32 %s15, 1
        %s162 = sand.u32 %s49, 1
        %s163 = scalar_lea.sflag [#allocation3], %s162
        %s164 = sand.u32 %s49, 1
        %s165 = smul.addr %s164, 256
        %s166 = scalar_lea.vmem [#allocation2], %s165
        // Predicated region
        $region33: #{generator_forward.3} parent=31 // pred_check
          %p167 = pneg %p62
        $region34: #{generator_forward.3} parent=31 // pred_check_branch
          %169 = sbr.rel (%p167) target = $region36
        $region35: #{generator_forward.3} parent=31 // pred_region
          %170 = dma.done %s163, 4096
        $region36: #{generator_forward.3} parent=31 // pred_fallthru
          _
        %p171 = pneg %p36
        %p172 = pneg %p33
        %s173 = sand.u32 %s49, 1
        %s174 = scalar_lea.sflag [#allocation3], %s173
        %s175 = sand.u32 %s49, 1
        %s176 = smul.addr %s175, 256
        %s177 = scalar_lea.vmem [#allocation2], %s176
        %p178 = pneg %p62
        %p179 = pneg %p59
        %p180 = pneg %p83
        %p181 = pneg %p80
        %p182 = pneg %p109
        %p183 = pneg %p106
        %s184 = sand.u32 %s96, 1
        %s185 = scalar_lea.sflag [#allocation4], %s184
        %s186 = sand.u32 %s96, 1
        %s187 = smul.addr %s186, 8
        %s188 = scalar_lea.vmem [#allocation5], %s187
        %s189 = smul.u32 2, %s20
        %v190 = vld [vmem:[%s0] sm:$0xf]
        %v191 = vld [vmem:[%s166] sm:$0xff]
        %v192 = vld [vmem:[%s166 + $0x8] sm:$0xff]
        %v193 = vld [vmem:[%s166 + $0x10] sm:$0xff]
        %v194 = vld [vmem:[%s166 + $0x18] sm:$0xff]
        %v195 = vld [vmem:[%s166 + $0x20] sm:$0xff]
        %v196 = vld [vmem:[%s166 + $0x28] sm:$0xff]
        %v197 = vld [vmem:[%s166 + $0x30] sm:$0xff]
        %v198 = vld [vmem:[%s166 + $0x38] sm:$0xff]
        %v199 = vld [vmem:[%s166 + $0x40] sm:$0xff]
        %v200 = vld [vmem:[%s166 + $0x48] sm:$0xff]
        %v201 = vld [vmem:[%s166 + $0x50] sm:$0xff]
        %v202 = vld [vmem:[%s166 + $0x58] sm:$0xff]
        %v203 = vld [vmem:[%s166 + $0x60] sm:$0xff]
        %v204 = vld [vmem:[%s166 + $0x68] sm:$0xff]
        %v205 = vld [vmem:[%s166 + $0x70] sm:$0xff]
        %v206 = vld [vmem:[%s166 + $0x78] sm:$0xff]
        %v207 = vld [vmem:[%s166 + $0x80] sm:$0xff]
        %v208 = vld [vmem:[%s166 + $0x88] sm:$0xff]
        %v209 = vld [vmem:[%s166 + $0x90] sm:$0xff]
        %v210 = vld [vmem:[%s166 + $0x98] sm:$0xff]
        %v211 = vld [vmem:[%s166 + $0xa0] sm:$0xff]
        %v212 = vld [vmem:[%s166 + $0xa8] sm:$0xff]
        %v213 = vld [vmem:[%s166 + $0xb0] sm:$0xff]
        %v214 = vld [vmem:[%s166 + $0xb8] sm:$0xff]
        %v215 = vld [vmem:[%s166 + $0xc0] sm:$0xff]
        %v216 = vld [vmem:[%s166 + $0xc8] sm:$0xff]
        %v217 = vld [vmem:[%s166 + $0xd0] sm:$0xff]
        %v218 = vld [vmem:[%s166 + $0xd8] sm:$0xff]
        %v219 = vld [vmem:[%s166 + $0xe0] sm:$0xff]
        %v220 = vld [vmem:[%s166 + $0xe8] sm:$0xff]
        %v221 = vld [vmem:[%s166 + $0xf0] sm:$0xff]
        %v222 = vld [vmem:[%s166 + $0xf8] sm:$0xff]
        %s223 = sshra.s32 %s20, 1
        %s224 = sand.u32 %s20, 1
        %s225 = sshra.s32 %s20, 1
        %s226 = sand.u32 %s20, 1
        %s227 = smul.u32 %s223, 2
        %s228 = smul.u32 %s227, 2
        %s229 = sadd.s32 %s228, %s226
        %s230 = scalar_lea.vmem %s2, %s229
        %v231 = vld [vmem:[%s230] ss:$2 sm:$0x3]
        %v233 = vlaneseq
        %v234 = vshrl.u32 %v233, 7
        %v235 = vsub.s32 0, %v234
        %v236 = vrot.slane %v231, %v235
        %v237 = vlaneseq
        %v238 = vshrl.u32 %v237, 7
        %v239 = vsub.s32 1, %v238
        %v240 = vrot.slane %v231, %v239
        %v245 = vunpack.c.l.s4 1983009808
        %v246 = vunpack.c.0.s8 %v245
        %v247 = vlaneseq
        %v248 = vshrl.u32 %v247, 7
        %v249 = vsub.s32 %v246, %v248
        %v250 = vrot.slane %v190, %v249
        %v251 = vcombine.high %v250, %v250
        %v286 = vunpack.c.l.b16 %v191
        %v287 = vunpack.c.h.b16 %v191
        %v288 = vunpack.c.l.b16 %v192
        %v289 = vunpack.c.h.b16 %v192
        %v290 = vunpack.c.l.b16 %v193
        %v291 = vunpack.c.h.b16 %v193
        %v292 = vunpack.c.l.b16 %v194
        %v293 = vunpack.c.h.b16 %v194
        %v294 = vunpack.c.l.b16 %v195
        %v295 = vunpack.c.h.b16 %v195
        %v296 = vunpack.c.l.b16 %v196
        %v297 = vunpack.c.h.b16 %v196
        %v298 = vunpack.c.l.b16 %v197
        %v299 = vunpack.c.h.b16 %v197
        %v300 = vunpack.c.l.b16 %v198
        %v301 = vunpack.c.h.b16 %v198
        %v302 = vunpack.c.l.b16 %v199
        %v303 = vunpack.c.h.b16 %v199
        %v304 = vunpack.c.l.b16 %v200
        %v305 = vunpack.c.h.b16 %v200
        %v306 = vunpack.c.l.b16 %v201
        %v307 = vunpack.c.h.b16 %v201
        %v308 = vunpack.c.l.b16 %v202
        %v309 = vunpack.c.h.b16 %v202
        %v310 = vunpack.c.l.b16 %v203
        %v311 = vunpack.c.h.b16 %v203
        %v312 = vunpack.c.l.b16 %v204
        %v313 = vunpack.c.h.b16 %v204
        %v314 = vunpack.c.l.b16 %v205
        %v315 = vunpack.c.h.b16 %v205
        %v316 = vunpack.c.l.b16 %v206
        %v317 = vunpack.c.h.b16 %v206
        %v318 = vunpack.c.l.b16 %v207
        %v319 = vunpack.c.h.b16 %v207
        %v320 = vunpack.c.l.b16 %v208
        %v321 = vunpack.c.h.b16 %v208
        %v322 = vunpack.c.l.b16 %v209
        %v323 = vunpack.c.h.b16 %v209
        %v324 = vunpack.c.l.b16 %v210
        %v325 = vunpack.c.h.b16 %v210
        %v326 = vunpack.c.l.b16 %v211
        %v327 = vunpack.c.h.b16 %v211
        %v328 = vunpack.c.l.b16 %v212
        %v329 = vunpack.c.h.b16 %v212
        %v330 = vunpack.c.l.b16 %v213
        %v331 = vunpack.c.h.b16 %v213
        %v332 = vunpack.c.l.b16 %v214
        %v333 = vunpack.c.h.b16 %v214
        %v334 = vunpack.c.l.b16 %v215
        %v335 = vunpack.c.h.b16 %v215
        %v336 = vunpack.c.l.b16 %v216
        %v337 = vunpack.c.h.b16 %v216
        %v338 = vunpack.c.l.b16 %v217
        %v339 = vunpack.c.h.b16 %v217
        %v340 = vunpack.c.l.b16 %v218
        %v341 = vunpack.c.h.b16 %v218
        %v342 = vunpack.c.l.b16 %v219
        %v343 = vunpack.c.h.b16 %v219
        %v344 = vunpack.c.l.b16 %v220
        %v345 = vunpack.c.h.b16 %v220
        %v346 = vunpack.c.l.b16 %v221
        %v347 = vunpack.c.h.b16 %v221
        %v348 = vunpack.c.l.b16 %v222
        %v349 = vunpack.c.h.b16 %v222
        %v350 = vpack.c.b16 %v288, %v286
        %v351 = vpack.c.b16 %v289, %v287
        %v352 = vpack.c.b16 %v292, %v290
        %v353 = vpack.c.b16 %v293, %v291
        %v354 = vpack.c.b16 %v296, %v294
        %v355 = vpack.c.b16 %v297, %v295
        %v356 = vpack.c.b16 %v300, %v298
        %v357 = vpack.c.b16 %v301, %v299
        %v358 = vpack.c.b16 %v304, %v302
        %v359 = vpack.c.b16 %v305, %v303
        %v360 = vpack.c.b16 %v308, %v306
        %v361 = vpack.c.b16 %v309, %v307
        %v362 = vpack.c.b16 %v312, %v310
        %v363 = vpack.c.b16 %v313, %v311
        %v364 = vpack.c.b16 %v316, %v314
        %v365 = vpack.c.b16 %v317, %v315
        %v366 = vpack.c.b16 %v320, %v318
        %v367 = vpack.c.b16 %v321, %v319
        %v368 = vpack.c.b16 %v324, %v322
        %v369 = vpack.c.b16 %v325, %v323
        %v370 = vpack.c.b16 %v328, %v326
        %v371 = vpack.c.b16 %v329, %v327
        %v372 = vpack.c.b16 %v332, %v330
        %v373 = vpack.c.b16 %v333, %v331
        %v374 = vpack.c.b16 %v336, %v334
        %v375 = vpack.c.b16 %v337, %v335
        %v376 = vpack.c.b16 %v340, %v338
        %v377 = vpack.c.b16 %v341, %v339
        %v378 = vpack.c.b16 %v344, %v342
        %v379 = vpack.c.b16 %v345, %v343
        %v380 = vpack.c.b16 %v348, %v346
        %v381 = vpack.c.b16 %v349, %v347
        %414 = vmatprep.subr.bf16.mxu0 %v365
        %415 = vmatpush1.bf16.msra.mxu0 %v364
        %416 = vmatprep.subr.bf16.mxu0 %v363
        %417 = vmatpush1.bf16.msra.mxu0 %v362
        %418 = vmatprep.subr.bf16.mxu0 %v361
        %419 = vmatpush1.bf16.msra.mxu0 %v360
        %420 = vmatprep.subr.bf16.mxu0 %v359
        %421 = vmatpush1.bf16.msra.mxu0 %v358
        %422 = vmatprep.subr.bf16.mxu0 %v357
        %423 = vmatpush1.bf16.msra.mxu0 %v356
        %424 = vmatprep.subr.bf16.mxu0 %v355
        %425 = vmatpush1.bf16.msra.mxu0 %v354
        %426 = vmatprep.subr.bf16.mxu0 %v353
        %427 = vmatpush1.bf16.msra.mxu0 %v352
        %428 = vmatprep.subr.bf16.mxu0 %v351
        %429 = vmatpush1.bf16.msra.mxu0 %v350
        %430 = vmatprep.subr.bf16.mxu0 %v381
        %431 = vmatpush2.bf16.msra.mxu0 %v380
        %432 = vmatprep.subr.bf16.mxu0 %v379
        %433 = vmatpush2.bf16.msra.mxu0 %v378
        %434 = vmatprep.subr.bf16.mxu0 %v377
        %435 = vmatpush2.bf16.msra.mxu0 %v376
        %436 = vmatprep.subr.bf16.mxu0 %v375
        %437 = vmatpush2.bf16.msra.mxu0 %v374
        %438 = vmatprep.subr.bf16.mxu0 %v373
        %439 = vmatpush2.bf16.msra.mxu0 %v372
        %440 = vmatprep.subr.bf16.mxu0 %v371
        %441 = vmatpush2.bf16.msra.mxu0 %v370
        %442 = vmatprep.subr.bf16.mxu0 %v369
        %443 = vmatpush2.bf16.msra.mxu0 %v368
        %444 = vmatprep.subr.bf16.mxu0 %v367
        %445 = vmatpush2.bf16.msra.mxu0 %v366
        %446 = vmatprep.mubr.bf16.mxu0 %v251
        %447 = vmatmul.mubr.bf16.gmra.mxu0 %v250
        %v448 = vpop.f32.mrf.mxu0
        %v449 = vadd.f32 %v236, %v448
        %v450 = vpop.f32.mrf.mxu0
        %v451 = vadd.f32 %v240, %v450
        %v452 = vpop.f32.mrf.mxu0
        %v453 = vpop.f32.mrf.mxu0
        %454 = vdwg.mxu0
        %v455 = vsub.f32 0.0, %v449
        %v456 = vsub.f32 0.0, %v451
        %v457 = vmul.f32 %v455, 1.442695
        %v458 = vpow.pop %v457
        %v459 = vmul.f32 %v456, 1.442695
        %v460 = vpow.pop %v459
        %v461 = vadd.f32 %v458, 1.0
        %v462 = vadd.f32 %v460, 1.0
        %v463 = vrcp.pop %v461
        %v464 = vrcp.pop %v462
        %v467 = vcombine.low %v463, %v464
        %469 = vst [vmem:[%s188] sm:$0xff] %v467
        %s470 = sand.u32 %s96, 1
        %s471 = scalar_lea.sflag [#allocation4], %s470
        %s472 = sand.u32 %s96, 1
        %s473 = smul.addr %s472, 8
        %s474 = scalar_lea.vmem [#allocation5], %s473
        // Predicated region
        $region37: #{generator_forward.3} parent=31 // pred_check
          %p475 = pneg %p106
        $region38: #{generator_forward.3} parent=31 // pred_check_branch
          %477 = sbr.rel (%p475) target = $region40
        $region39: #{generator_forward.3} parent=31 // pred_region
          %s478 = smul.u32 2, %s20
          %s480 = ssub.s32 128, 128
          %481 = vsyncadd %s471, %s480
          %s482 = smul.addr %s478, 64
          %s483 = scalar_lea.hbm %s3, %s482
          %s485 = sshll.u32 %s474, 4
          %s486 = int_to_ptr.vmem [resolvable:$true] %s485
          %488 = dma.vmem_to_hbm [thread:$0]  %s486, 128, %s483, %s471
        $region40: #{generator_forward.3} parent=31 // pred_fallthru
          _
      $region32: #{generator_forward.3} parent=5 // pred_fallthru
        _
      %p489 = scmp.le.s32.totalorder 2, %s15
      // Predicated region
      $region41: #{generator_forward.3} parent=5 // pred_check
        %p490 = pneg %p489
      $region42: #{generator_forward.3} parent=5 // pred_check_branch
        %492 = sbr.rel (%p490) target = $region44
      $region43: #{generator_forward.3} parent=5 // pred_region
        %s493 = ssub.s32 %s15, 2
        // Predicated region
        $region45: #{generator_forward.3} parent=43 // pred_check
          %p494 = pneg %p112
        $region46: #{generator_forward.3} parent=43 // pred_check_branch
          %496 = sbr.rel (%p494) target = $region48
        $region47: #{generator_forward.3} parent=43 // pred_region
          %s497 = sand.u32 %s97, 1
          %s498 = scalar_lea.sflag [#allocation4], %s497
          %s499 = sand.u32 %s97, 1
          %s500 = smul.addr %s499, 8
          %s501 = scalar_lea.vmem [#allocation5], %s500
          %502 = dma.done %s498, 128
        $region48: #{generator_forward.3} parent=43 // pred_fallthru
          _
      $region44: #{generator_forward.3} parent=5 // pred_fallthru
        _
    $region6: #{generator_forward.3} parent=1 // loop_footer
      %s19 = sadd.s32 1, %s15
    $region7: #{generator_forward.3} parent=1 // loop_footer_branch
      %14 = sbr.rel target = $region3
    $region8: #{generator_forward.3} parent=1 // loop_exit
      _
    %503 = vsyncpa [#allocation3], 1
    %s504 = scalar_lea.sflag [#allocation3], 1
    %505 = vsyncpa %s504, 1
    %506 = vsyncpa [#allocation4], 1
    %s507 = scalar_lea.sflag [#allocation4], 1
    %508 = vsyncpa %s507, 1

</llo_original>
